<compile_context>
chip_gen: v6e
topology: v6e:2x2x1
jax: 0.10.0
libtpu: 0.0.40
codegen_flags: <defaults>
</compile_context>

<pallas_src>
import math

import jax
import jax.numpy as jnp
from jax.experimental import pallas as pl
from jax.experimental.pallas import tpu as pltpu


# OGB `get_bond_feature_dims()` values: (bond type, bond stereo, is_conjugated).
BOND_FEATURE_DIMS = (5, 6, 2)

_LANE = 128
_SUBLANE = 8
# Fuse per-feature vocabularies into one combination table when the product of
# the (tiny) vocabulary sizes stays at/below this many rows.
_FUSE_MAX_ROWS = 512


def _round_up(x, m):
    return ((x + m - 1) // m) * m


def _bond_encoder_kernel(idx_ref, w_hi_ref, w_lo_ref, o_ref):
    """One edge-tile of the embedding-lookup sum.

    idx_ref:  (tile_e, Fk) int32 — per-edge row indices into the table
              (Fk == 1 on the fused-vocabulary path).
    w_hi_ref: (total_pad, emb_dim) bf16 — high half of the f32 table.
    w_lo_ref: (total_pad, emb_dim) bf16 — residual (w - hi) of the f32 table.
    o_ref:    (tile_e, emb_dim) — per-edge embedding sum.
    """
    idx = idx_ref[...]                                    # (tile_e, Fk)
    tile_e = idx.shape[0]
    total = w_hi_ref.shape[0]

    # (Multi-)one-hot selector over the padded vocabulary.  The Fk index
    # columns address disjoint row ranges, so bool OR + a single cast suffices;
    # on the fused path this is just one compare + one cast.
    iota = jax.lax.broadcasted_iota(jnp.int32, (tile_e, total), 1)
    sel = iota == idx[:, 0:1]
    for f in range(1, idx.shape[1]):                      # Fk is tiny & static
        sel = jnp.logical_or(sel, iota == idx[:, f:f + 1])
    sel = sel.astype(w_hi_ref.dtype)                      # 0/1 is exact in bf16

    # Selection matmuls on the MXU: two DEFAULT-precision bf16 passes (hi + lo)
    # recover the f32 table values to ~1e-6 (no Precision.HIGHEST needed).
    hi = jnp.dot(sel, w_hi_ref[...], preferred_element_type=jnp.float32)
    lo = jnp.dot(sel, w_lo_ref[...], preferred_element_type=jnp.float32)
    o_ref[...] = (hi + lo).astype(o_ref.dtype)


def bond_encoder_forward(edge_attr, emb_tables, *, tile_e=None, fuse=None,
                         out_dtype=None):
    """BondEncoder forward pass.

    edge_attr:  (E, F) integer array of categorical bond features.
    emb_tables: list of F embedding tables, emb_tables[i]: (dims[i], emb_dim).
    Returns (E, emb_dim): sum_i emb_tables[i][edge_attr[:, i]].
    """
    num_edges, num_feats = edge_attr.shape
    assert len(emb_tables) == num_feats, "one embedding table per bond feature"
    emb_dim = int(emb_tables[0].shape[1])
    dtype = emb_tables[0].dtype
    out_dtype = dtype if out_dtype is None else out_dtype  # bf16 halves writeback

    dims = [int(t.shape[0]) for t in emb_tables]
    prod_dims = 1
    for d in dims:
        prod_dims *= d
    if fuse is None:
        fuse = prod_dims <= _FUSE_MAX_ROWS

    edge_attr = edge_attr.astype(jnp.int32)
    if fuse:
        # Combination table: fused[((a*d1)+b)*d2+c ...] = T0[a]+T1[b]+T2[c]+...
        # (tiny precompute: prod(dims) x emb_dim).  Forward/inference only.
        w = emb_tables[0].astype(jnp.float32)
        for t in emb_tables[1:]:
            w = (w[:, None, :] + t.astype(jnp.float32)[None, :, :]).reshape(-1, emb_dim)
        fidx = edge_attr[:, 0]
        for f in range(1, num_feats):
            fidx = fidx * dims[f] + edge_attr[:, f]
        idx = fidx[:, None]                                # (E, 1)
        total = prod_dims
    else:
        # Multi-hot fallback: concatenated tables + per-feature offsets.
        w = jnp.concatenate([t.astype(jnp.float32) for t in emb_tables], axis=0)
        offsets = [0]
        for d in dims[:-1]:
            offsets.append(offsets[-1] + d)
        idx = edge_attr + jnp.asarray(offsets, jnp.int32)[None, :]   # (E, F)
        total = sum(dims)

    # Lane-dense / MXU-aligned contraction dim; padded rows are zero and are
    # never selected since indices stay in [0, total).
    total_pad = _round_up(max(total, _LANE), _LANE)
    if total_pad != total:
        w = jnp.pad(w, ((0, total_pad - total), (0, 0)))

    # bf16 hi/lo split of the f32 table (selection with a 0/1 selector is
    # exact for each bf16 half; hi + lo ~ f32 to ~1e-6).
    w_hi = w.astype(jnp.bfloat16)
    w_lo = (w - w_hi.astype(jnp.float32)).astype(jnp.bfloat16)

    num_idx_cols = int(idx.shape[1])

    # ---- Edge-axis tiling --------------------------------------------------
    # VMEM bytes per edge row across the two double-buffered blocks: the
    # output row PLUS the lane-padded index row (a (tile_e, Fk) int32 block
    # occupies a full 128-lane tile per row in VMEM, i.e. 512 B regardless
    # of Fk).
    out_row_bytes = emb_dim * jnp.dtype(out_dtype).itemsize
    idx_row_bytes = _round_up(num_idx_cols, _LANE) * 4
    per_edge_bytes = 2 * (out_row_bytes + idx_row_bytes)
    if tile_e is None:
        budget = 10 << 20   # block budget; tables (~130 KiB) + headroom on top
        tile_e = max(512, (budget // per_edge_bytes) // _SUBLANE * _SUBLANE)
        # v7x has 2 TensorCores: keep >= 2 grid steps so the "parallel" grid
        # axis can actually be sharded across cores.
        tile_e = min(tile_e, max(_SUBLANE, _round_up(-(-num_edges // 2), _SUBLANE)))
    else:
        tile_e = _round_up(max(int(tile_e), _SUBLANE), _SUBLANE)
        tile_e = min(tile_e, _round_up(num_edges, _SUBLANE))

    grid = (pl.cdiv(num_edges, tile_e),)   # ragged tail: OOB block writes clipped

    return pl.pallas_call(
        _bond_encoder_kernel,
        out_shape=jax.ShapeDtypeStruct((num_edges, emb_dim), out_dtype),
        grid_spec=pltpu.PrefetchScalarGridSpec(
            num_scalar_prefetch=0,
            grid=grid,
            in_specs=[
                pl.BlockSpec((tile_e, num_idx_cols), lambda i: (i, 0)),
                # Full tables, constant index_map -> resident in VMEM.
                pl.BlockSpec((total_pad, emb_dim), lambda i: (0, 0)),
                pl.BlockSpec((total_pad, emb_dim), lambda i: (0, 0)),
            ],
            out_specs=pl.BlockSpec((tile_e, emb_dim), lambda i: (i, 0)),
        ),
        compiler_params=pltpu.CompilerParams(
            dimension_semantics=("parallel",),
            # Auto-sized blocks stay ~10 MiB (incl. the lane-padded idx block);
            # make the scoped-VMEM budget explicit — 32 MiB is safe on v5e/v6e
            # (128 MiB physical) and v7x (64 MiB physical per TensorCore).
            vmem_limit_bytes=32 * 1024 * 1024,
        ),
    )(idx, w_hi, w_lo)


if __name__ == "__main__":
    key = jax.random.PRNGKey(0)

    emb_dim = 128          # lane-dense embedding width (multiple of 128)
    num_edges = 520        # exercises full + ragged edge tiles below
    dims = BOND_FEATURE_DIMS

    # Parameters: xavier_uniform init, matching the PyTorch module.
    keys = jax.random.split(key, 2 * len(dims))
    tables = []
    for i, d in enumerate(dims):
        limit = math.sqrt(6.0 / (d + emb_dim))
        tables.append(jax.random.uniform(
            keys[i], (d, emb_dim), dtype=jnp.float32, minval=-limit, maxval=limit))

    # Inputs: categorical bond features, column i in [0, dims[i]).
    cols = [jax.random.randint(keys[len(dims) + i], (num_edges,), 0, d)
            for i, d in enumerate(dims)]
    edge_attr = jnp.stack(cols, axis=1).astype(jnp.int32)

    # Pure-JAX reference: sum of per-feature embedding lookups.
    ref = sum(tables[i][edge_attr[:, i]] for i in range(len(dims)))

    # Default fused path (2-step grid: megacore-shardable + ragged tail),
    # an explicitly small-tiled run (5-step grid), and the multi-hot fallback.
    y = jax.block_until_ready(bond_encoder_forward(edge_attr, tables))
    y_tiled = jax.block_until_ready(
        bond_encoder_forward(edge_attr, tables, tile_e=128))
    y_multihot = jax.block_until_ready(
        bond_encoder_forward(edge_attr, tables, fuse=False))

    assert y.shape == (num_edges, emb_dim) and y.dtype == jnp.float32
    assert jnp.allclose(y, ref, atol=1e-5), "mismatch vs reference (fused)"
    assert jnp.allclose(y_tiled, ref, atol=1e-5), "mismatch vs reference (tiled)"
    assert jnp.allclose(y_multihot, ref, atol=1e-5), "mismatch vs reference (multi-hot)"
    print("KERNEL_OK")
</pallas_src>

<mosaic_0001>
module attributes {stable_mosaic.version = 11 : i64} {
  func.func @_bond_encoder_kernel(%arg0: i32, %arg1: memref<264x1xi32, #tpu.memory_space<vmem>>, %arg2: memref<128x128xbf16, #tpu.memory_space<vmem>>, %arg3: memref<128x128xbf16, #tpu.memory_space<vmem>>, %arg4: memref<264x128xf32, #tpu.memory_space<vmem>>) attributes {dimension_semantics = [#tpu.dimension_semantics<parallel>], iteration_bounds = array<i64: 2>, scalar_prefetch = 0 : i64, scratch_operands = 0 : i64, tpu.core_type = #tpu.core_type<tc>, window_params = [{transform_indices = @transform_0, window_bounds = array<i64: 264, 1>}, {pipeline_mode = #tpu.pipeline_mode<synchronous>, transform_indices = @transform_1, window_bounds = array<i64: 128, 128>}, {pipeline_mode = #tpu.pipeline_mode<synchronous>, transform_indices = @transform_2, window_bounds = array<i64: 128, 128>}, {transform_indices = @transform_3, window_bounds = array<i64: 264, 128>}]} {
    %c0 = arith.constant 0 : index
    %c0_0 = arith.constant 0 : index
    %0 = vector.load %arg1[%c0, %c0_0] : memref<264x1xi32, #tpu.memory_space<vmem>>, vector<264x1xi32>
    %1 = tpu.iota {dimensions = array<i32: 1>} : vector<264x128xi32>
    %2 = vector.broadcast %0 : vector<264x1xi32> to vector<264x128xi32>
    %3 = arith.cmpi eq, %1, %2 : vector<264x128xi32>
    %4 = arith.extui %3 : vector<264x128xi1> to vector<264x128xi32>
    %5 = arith.sitofp %4 : vector<264x128xi32> to vector<264x128xf32>
    %6 = arith.truncf %5 : vector<264x128xf32> to vector<264x128xbf16>
    %c0_1 = arith.constant 0 : index
    %c0_2 = arith.constant 0 : index
    %7 = vector.load %arg2[%c0_1, %c0_2] : memref<128x128xbf16, #tpu.memory_space<vmem>>, vector<128x128xbf16>
    %cst = arith.constant dense<0.000000e+00> : vector<264x128xf32>
    %8 = tpu.matmul %6, %7, %cst {dimension_numbers = #tpu.dot_dimension_numbers<[1], [0], [0], [1], [0, 0, 1, 1], [], []>} : vector<264x128xbf16>, vector<128x128xbf16>, vector<264x128xf32> -> vector<264x128xf32>
    %c0_3 = arith.constant 0 : index
    %c0_4 = arith.constant 0 : index
    %9 = vector.load %arg3[%c0_3, %c0_4] : memref<128x128xbf16, #tpu.memory_space<vmem>>, vector<128x128xbf16>
    %cst_5 = arith.constant dense<0.000000e+00> : vector<264x128xf32>
    %10 = tpu.matmul %6, %9, %cst_5 {dimension_numbers = #tpu.dot_dimension_numbers<[1], [0], [0], [1], [0, 0, 1, 1], [], []>} : vector<264x128xbf16>, vector<128x128xbf16>, vector<264x128xf32> -> vector<264x128xf32>
    %11 = arith.addf %8, %10 : vector<264x128xf32>
    %c0_6 = arith.constant 0 : index
    %c0_7 = arith.constant 0 : index
    %12 = vector.load %arg4[%c0_6, %c0_7] : memref<264x128xf32, #tpu.memory_space<vmem>>, vector<264x128xf32>
    tpu.vector_store %arg4[%c0_6, %c0_7], %11 {strides = array<i32>} : memref<264x128xf32, #tpu.memory_space<vmem>>, vector<264x128xf32>,
    return
  }
  func.func @transform_0(%arg0: i32) -> (i32, i32) {
    %c0_i32 = arith.constant 0 : i32
    %c0_i32_0 = arith.constant 0 : i32
    return %arg0, %c0_i32 : i32, i32
  }
  func.func @transform_1(%arg0: i32) -> (i32, i32) {
    %c0_i32 = arith.constant 0 : i32
    %c0_i32_0 = arith.constant 0 : i32
    %c0_i32_1 = arith.constant 0 : i32
    return %c0_i32, %c0_i32_0 : i32, i32
  }
  func.func @transform_2(%arg0: i32) -> (i32, i32) {
    %c0_i32 = arith.constant 0 : i32
    %c0_i32_0 = arith.constant 0 : i32
    %c0_i32_1 = arith.constant 0 : i32
    return %c0_i32, %c0_i32_0 : i32, i32
  }
  func.func @transform_3(%arg0: i32) -> (i32, i32) {
    %c0_i32 = arith.constant 0 : i32
    %c0_i32_0 = arith.constant 0 : i32
    return %arg0, %c0_i32 : i32, i32
  }
}

</mosaic_0001>

<llo_original>
// kernel: tpu_custom_call.1
$region0: #{tpu_custom_call.1}
  #allocation0 [shape = 'u32[]', space=smem, size = 0x4, offset = 0x4, fixed_abs, tag = 'smem constant byte address 0x4 - core index']
  #allocation1 [shape = 'u32[144,128]{1,0:T(1,128)}', space=vmem, size = 0x12000, scoped, tag = 'internal scratch']
  %s0 = inlined_call_operand.vmem [shape: s32[520,1], index: 0, kind: input, shape index: {}]
  %s1 = inlined_call_operand.vmem [shape: bf16[128,128], index: 1, kind: input, shape index: {}]
  %s2 = inlined_call_operand.vmem [shape: bf16[128,128], index: 2, kind: input, shape index: {}]
  %s3 = inlined_call_operand.hbm [shape: f32[520,128], index: 3, kind: output, shape index: {}]
  %s4 = sld [smem:[#allocation0]]
  $region45: #{tpu_custom_call.1} parent=0
    _
  %s6 = ssub.s32 1, %s4
  %s7 = scalar_select 0, %s6, %s4
  $region1: #{tpu_custom_call.1} parent=0
    #allocation2 [shape = 'u8[270336]{0}', space=vmem, size = 0x42000, scoped, tag = 'output window, operand 0']
    #allocation3 [shape = 's32[2]{0}', space=sflag, size = 0x8, scoped, tag = 'scoped memory for tpu_custom_call.1']
    %8 = vsyncpa [#allocation3], 0
    %s9 = scalar_lea.sflag [#allocation3], 1
    %10 = vsyncpa %s9, 0
    loop: start=0, step=1, limit=4
    $region2: #{tpu_custom_call.1} parent=1 // loop_pre_header
      _
    $region3: #{tpu_custom_call.1} parent=1 // loop_header
      %s12 = sphi 0, %s16
      %p13 = scmp.ge.s32.totalorder %s12, 4
      %s22 = sphi 0, %s24
      %s25 = sphi 0, %s22
      %s26 = sphi 0, %s25
      %s42 = sphi 0, %s26
      %s46 = sphi 0, %s46
      %s48 = sphi 0, %s46
      %s49 = sphi 0, %s48
      %s63 = sphi 0, %s49
      %s67 = sphi 0, %s67
      %s69 = sphi 0, %s67
      %s70 = sphi 0, %s69
      %s84 = sphi 0, %s70
      %s90 = sphi 0, %s92
      %s93 = sphi 0, %s90
      %s94 = sphi 0, %s93
      %s110 = sphi 0, %s94
    $region4: #{tpu_custom_call.1} parent=1 // loop_header_branch
      %15 = sbr.rel (%p13) target = $region8
    $region5: #{tpu_custom_call.1} parent=1 // loop_body
      %s17 = ssub.s32 %s12, 1
      %s18 = ssub.s32 %s12, 2
      %s19 = sadd.s32 %s12, 1
      %s20 = ssub.s32 %s12, %s19
      %p21 = scmp.eq.s32.totalorder %s20, 0
      %s23 = sadd.s32 %s22, 1
      %s24 = scalar_select %p21, %s22, %s23
      %p27 = pneg %p21
      %p28 = scmp.eq.s32.totalorder %s12, 1
      %p29 = por %p27, %p28
      %p30 = scmp.ne.s32.totalorder %s22, %s25
      %p31 = scmp.eq.s32.totalorder %s12, 0
      %p32 = por %p30, %p31
      %p33 = scmp.ne.s32.totalorder %s22, %s25
      %p34 = scmp.eq.s32.totalorder %s17, 1
      %p35 = por %p33, %p34
      %p36 = scmp.ne.s32.totalorder %s25, %s26
      %p37 = scmp.eq.s32.totalorder %s17, 0
      %p38 = por %p36, %p37
      %p39 = scmp.ne.s32.totalorder %s25, %s26
      %p40 = scmp.eq.s32.totalorder %s18, 1
      %p41 = por %p39, %p40
      %p43 = scmp.ne.s32.totalorder %s26, %s42
      %p44 = scmp.eq.s32.totalorder %s18, 0
      %p45 = por %p43, %p44
      %s47 = sadd.s32 %s46, 1
      %p50 = scmp.eq.s32.totalorder %s12, 1
      %p51 = scmp.ne.s32.totalorder %s46, %s48
      %p52 = scmp.eq.s32.totalorder %s12, 0
      %p53 = por %p51, %p52
      %p54 = scmp.ne.s32.totalorder %s46, %s48
      %p55 = scmp.eq.s32.totalorder %s17, 1
      %p56 = por %p54, %p55
      %p57 = scmp.ne.s32.totalorder %s48, %s49
      %p58 = scmp.eq.s32.totalorder %s17, 0
      %p59 = por %p57, %p58
      %p60 = scmp.ne.s32.totalorder %s48, %s49
      %p61 = scmp.eq.s32.totalorder %s18, 1
      %p62 = por %p60, %p61
      %p64 = scmp.ne.s32.totalorder %s49, %s63
      %p65 = scmp.eq.s32.totalorder %s18, 0
      %p66 = por %p64, %p65
      %s68 = sadd.s32 %s67, 1
      %p71 = scmp.eq.s32.totalorder %s12, 1
      %p72 = scmp.ne.s32.totalorder %s67, %s69
      %p73 = scmp.eq.s32.totalorder %s12, 0
      %p74 = por %p72, %p73
      %p75 = scmp.ne.s32.totalorder %s67, %s69
      %p76 = scmp.eq.s32.totalorder %s17, 1
      %p77 = por %p75, %p76
      %p78 = scmp.ne.s32.totalorder %s69, %s70
      %p79 = scmp.eq.s32.totalorder %s17, 0
      %p80 = por %p78, %p79
      %p81 = scmp.ne.s32.totalorder %s69, %s70
      %p82 = scmp.eq.s32.totalorder %s18, 1
      %p83 = por %p81, %p82
      %p85 = scmp.ne.s32.totalorder %s70, %s84
      %p86 = scmp.eq.s32.totalorder %s18, 0
      %p87 = por %p85, %p86
      %s88 = ssub.s32 %s12, %s19
      %p89 = scmp.eq.s32.totalorder %s88, 0
      %s91 = sadd.s32 %s90, 1
      %s92 = scalar_select %p89, %s90, %s91
      %p95 = pneg %p89
      %p96 = scmp.eq.s32.totalorder %s12, 1
      %p97 = por %p95, %p96
      %p98 = scmp.ne.s32.totalorder %s90, %s93
      %p99 = scmp.eq.s32.totalorder %s12, 0
      %p100 = por %p98, %p99
      %p101 = scmp.ne.s32.totalorder %s90, %s93
      %p102 = scmp.eq.s32.totalorder %s17, 1
      %p103 = por %p101, %p102
      %p104 = scmp.ne.s32.totalorder %s93, %s94
      %p105 = scmp.eq.s32.totalorder %s17, 0
      %p106 = por %p104, %p105
      %p107 = scmp.ne.s32.totalorder %s93, %s94
      %p108 = scmp.eq.s32.totalorder %s18, 1
      %p109 = por %p107, %p108
      %p111 = scmp.ne.s32.totalorder %s94, %s110
      %p112 = scmp.eq.s32.totalorder %s18, 0
      %p113 = por %p111, %p112
      %p114 = scmp.le.s32.totalorder 1, %s12
      %p115 = scmp.lt.s32.totalorder %s12, 3
      %p116 = pnand %p114, %p115
      %p117 = pneg %p116
      // Predicated region
      $region9: #{tpu_custom_call.1} parent=5 // pred_check
        _
      $region10: #{tpu_custom_call.1} parent=5 // pred_check_branch
        %119 = sbr.rel (%p116) target = $region12
      $region11: #{tpu_custom_call.1} parent=5 // pred_region
        %s120 = ssub.s32 %s12, 1
        // Predicated region
        $region13: #{tpu_custom_call.1} parent=11 // pred_check
          %p121 = pneg %p59
        $region14: #{tpu_custom_call.1} parent=11 // pred_check_branch
          %123 = sbr.rel (%p121) target = $region16
        $region15: #{tpu_custom_call.1} parent=11 // pred_region
          _
        $region16: #{tpu_custom_call.1} parent=11 // pred_fallthru
          _
        // Predicated region
        $region17: #{tpu_custom_call.1} parent=11 // pred_check
          %p124 = pneg %p80
        $region18: #{tpu_custom_call.1} parent=11 // pred_check_branch
          %126 = sbr.rel (%p124) target = $region20
        $region19: #{tpu_custom_call.1} parent=11 // pred_region
          _
        $region20: #{tpu_custom_call.1} parent=11 // pred_fallthru
          _
      $region12: #{tpu_custom_call.1} parent=5 // pred_fallthru
        _
      %p127 = scmp.lt.s32.totalorder %s12, 2
      // Predicated region
      $region21: #{tpu_custom_call.1} parent=5 // pred_check
        %p128 = pneg %p127
      $region22: #{tpu_custom_call.1} parent=5 // pred_check_branch
        %130 = sbr.rel (%p128) target = $region24
      $region23: #{tpu_custom_call.1} parent=5 // pred_region
        // Predicated region
        $region25: #{tpu_custom_call.1} parent=23 // pred_check
          %p131 = pneg %p32
        $region26: #{tpu_custom_call.1} parent=23 // pred_check_branch
          %133 = sbr.rel (%p131) target = $region28
        $region27: #{tpu_custom_call.1} parent=23 // pred_region
          %s134 = smul.u32 33, %s12
          %s135 = ssub.s32 65, %s134
          %p136 = scmp.lt.s32.totalorder %s135, 33
          %s137 = scalar_select %p136, %s135, 33
          %s138 = smul.u32 128, %s137
          %p139 = scmp.lt.s32.totalorder %s134, 64
          %s140 = scalar_select %p139, %s134, 64
          %s141 = smul.addr %s140, 8
          %s142 = scalar_lea.vmem %s0, %s141
          %s143 = smul.u32 33, %s12
          %s144 = ssub.s32 65, %s143
          %p145 = scmp.lt.s32.totalorder %s144, 33
          %s146 = scalar_select %p145, %s144, 33
          %s147 = smul.u32 128, %s146
        $region28: #{tpu_custom_call.1} parent=23 // pred_fallthru
          _
      $region24: #{tpu_custom_call.1} parent=5 // pred_fallthru
        _
      %p148 = scmp.le.s32.totalorder 1, %s12
      %p149 = scmp.lt.s32.totalorder %s12, 3
      %p150 = pnand %p148, %p149
      %p151 = pneg %p150
      // Predicated region
      $region29: #{tpu_custom_call.1} parent=5 // pred_check
        _
      $region30: #{tpu_custom_call.1} parent=5 // pred_check_branch
        %153 = sbr.rel (%p150) target = $region32
      $region31: #{tpu_custom_call.1} parent=5 // pred_region
        %s154 = ssub.s32 %s12, 1
        %s155 = smul.u32 33, %s17
        %s156 = ssub.s32 65, %s155
        %p157 = scmp.lt.s32.totalorder %s156, 33
        %s158 = scalar_select %p157, %s156, 33
        %s159 = smul.u32 128, %s158
        %p160 = scmp.lt.s32.totalorder %s155, 64
        %s161 = scalar_select %p160, %s155, 64
        %s162 = smul.addr %s161, 8
        %s163 = scalar_lea.vmem %s0, %s162
        %p164 = pneg %p38
        %p165 = pneg %p35
        %p166 = pneg %p59
        %p167 = pneg %p56
        %p168 = pneg %p80
        %p169 = pneg %p77
        %p170 = pneg %p106
        %p171 = pneg %p103
        %s172 = sand.u32 %s93, 1
        %s173 = scalar_lea.sflag [#allocation3], %s172
        %s174 = sand.u32 %s93, 1
        %s175 = smul.addr %s174, 264
        %s176 = scalar_lea.vmem [#allocation2], %s175
        %s177 = smul.u32 33, %s17
        %s178 = ssub.s32 65, %s177
        %p179 = scmp.lt.s32.totalorder %s178, 33
        %s180 = scalar_select %p179, %s178, 33
        %s181 = smul.u32 128, %s180
        %p182 = scmp.lt.s32.totalorder %s177, 64
        %s183 = scalar_select %p182, %s177, 64
        %s184 = smul.addr %s183, 8
        %s185 = scalar_lea.vmem %s0, %s184
        %s186 = smul.u32 33, %s17
        %s187 = ssub.s32 65, %s186
        %p188 = scmp.lt.s32.totalorder %s187, 33
        %s189 = scalar_select %p188, %s187, 33
        %s190 = smul.u32 128, %s189
        %s191 = smul.u32 33, %s17
        %s192 = ssub.s32 65, %s191
        %p193 = scmp.lt.s32.totalorder %s192, 33
        %s194 = scalar_select %p193, %s192, 33
        %s195 = smul.u32 128, %s194
        %v197 = vld [vmem:[%s185] sm:$0xff]
        %v198 = vld [vmem:[%s185 + $0x8] sm:$0xff]
        %v199 = vld [vmem:[%s185 + $0x10] sm:$0xff]
        %v200 = vld [vmem:[%s185 + $0x18] sm:$0xff]
        %v201 = vld [vmem:[%s185 + $0x20] sm:$0xff]
        %v202 = vld [vmem:[%s185 + $0x28] sm:$0xff]
        %v203 = vld [vmem:[%s185 + $0x30] sm:$0xff]
        %v204 = vld [vmem:[%s185 + $0x38] sm:$0xff]
        %v205 = vld [vmem:[%s185 + $0x40] sm:$0xff]
        %v206 = vld [vmem:[%s185 + $0x48] sm:$0xff]
        %v207 = vld [vmem:[%s185 + $0x50] sm:$0xff]
        %v208 = vld [vmem:[%s185 + $0x58] sm:$0xff]
        %v209 = vld [vmem:[%s185 + $0x60] sm:$0xff]
        %v210 = vld [vmem:[%s185 + $0x68] sm:$0xff]
        %v211 = vld [vmem:[%s185 + $0x70] sm:$0xff]
        %v212 = vld [vmem:[%s185 + $0x78] sm:$0xff]
        %v213 = vld [vmem:[%s185 + $0x80] sm:$0xff]
        %v214 = vld [vmem:[%s185 + $0x88] sm:$0xff]
        %v215 = vld [vmem:[%s185 + $0x90] sm:$0xff]
        %v216 = vld [vmem:[%s185 + $0x98] sm:$0xff]
        %v217 = vld [vmem:[%s185 + $0xa0] sm:$0xff]
        %v218 = vld [vmem:[%s185 + $0xa8] sm:$0xff]
        %v219 = vld [vmem:[%s185 + $0xb0] sm:$0xff]
        %v220 = vld [vmem:[%s185 + $0xb8] sm:$0xff]
        %v221 = vld [vmem:[%s185 + $0xc0] sm:$0xff]
        %v222 = vld [vmem:[%s185 + $0xc8] sm:$0xff]
        %v223 = vld [vmem:[%s185 + $0xd0] sm:$0xff]
        %v224 = vld [vmem:[%s185 + $0xd8] sm:$0xff]
        %v225 = vld [vmem:[%s185 + $0xe0] sm:$0xff]
        %v226 = vld [vmem:[%s185 + $0xe8] sm:$0xff]
        %v227 = vld [vmem:[%s185 + $0xf0] sm:$0xff]
        %v228 = vld [vmem:[%s185 + $0xf8] sm:$0xff]
        %v229 = vld [vmem:[%s185 + $0x100] sm:$0xff]
        %v230 = vlaneseq
        %v231 = vand.u32 %v230, 127
        %232 = vset.pattern.permute.xlu0 0
        %233 = vperm.xlu0 %232, %v197
        %v234 = vpop.permute.xlu0 %233
        %235 = vset.pattern.permute.xlu0 0
        %236 = vperm.xlu0 %235, %v198
        %v237 = vpop.permute.xlu0 %236
        %238 = vset.pattern.permute.xlu0 0
        %239 = vperm.xlu0 %238, %v199
        %v240 = vpop.permute.xlu0 %239
        %241 = vset.pattern.permute.xlu0 0
        %242 = vperm.xlu0 %241, %v200
        %v243 = vpop.permute.xlu0 %242
        %244 = vset.pattern.permute.xlu0 0
        %245 = vperm.xlu0 %244, %v201
        %v246 = vpop.permute.xlu0 %245
        %247 = vset.pattern.permute.xlu0 0
        %248 = vperm.xlu0 %247, %v202
        %v249 = vpop.permute.xlu0 %248
        %250 = vset.pattern.permute.xlu0 0
        %251 = vperm.xlu0 %250, %v203
        %v252 = vpop.permute.xlu0 %251
        %253 = vset.pattern.permute.xlu0 0
        %254 = vperm.xlu0 %253, %v204
        %v255 = vpop.permute.xlu0 %254
        %256 = vset.pattern.permute.xlu0 0
        %257 = vperm.xlu0 %256, %v205
        %v258 = vpop.permute.xlu0 %257
        %259 = vset.pattern.permute.xlu0 0
        %260 = vperm.xlu0 %259, %v206
        %v261 = vpop.permute.xlu0 %260
        %262 = vset.pattern.permute.xlu0 0
        %263 = vperm.xlu0 %262, %v207
        %v264 = vpop.permute.xlu0 %263
        %265 = vset.pattern.permute.xlu0 0
        %266 = vperm.xlu0 %265, %v208
        %v267 = vpop.permute.xlu0 %266
        %268 = vset.pattern.permute.xlu0 0
        %269 = vperm.xlu0 %268, %v209
        %v270 = vpop.permute.xlu0 %269
        %271 = vset.pattern.permute.xlu0 0
        %272 = vperm.xlu0 %271, %v210
        %v273 = vpop.permute.xlu0 %272
        %274 = vset.pattern.permute.xlu0 0
        %275 = vperm.xlu0 %274, %v211
        %v276 = vpop.permute.xlu0 %275
        %277 = vset.pattern.permute.xlu0 0
        %278 = vperm.xlu0 %277, %v212
        %v279 = vpop.permute.xlu0 %278
        %280 = vset.pattern.permute.xlu0 0
        %281 = vperm.xlu0 %280, %v213
        %v282 = vpop.permute.xlu0 %281
        %283 = vset.pattern.permute.xlu0 0
        %284 = vperm.xlu0 %283, %v214
        %v285 = vpop.permute.xlu0 %284
        %286 = vset.pattern.permute.xlu0 0
        %287 = vperm.xlu0 %286, %v215
        %v288 = vpop.permute.xlu0 %287
        %289 = vset.pattern.permute.xlu0 0
        %290 = vperm.xlu0 %289, %v216
        %v291 = vpop.permute.xlu0 %290
        %292 = vset.pattern.permute.xlu0 0
        %293 = vperm.xlu0 %292, %v217
        %v294 = vpop.permute.xlu0 %293
        %295 = vset.pattern.permute.xlu0 0
        %296 = vperm.xlu0 %295, %v218
        %v297 = vpop.permute.xlu0 %296
        %298 = vset.pattern.permute.xlu0 0
        %299 = vperm.xlu0 %298, %v219
        %v300 = vpop.permute.xlu0 %299
        %301 = vset.pattern.permute.xlu0 0
        %302 = vperm.xlu0 %301, %v220
        %v303 = vpop.permute.xlu0 %302
        %304 = vset.pattern.permute.xlu0 0
        %305 = vperm.xlu0 %304, %v221
        %v306 = vpop.permute.xlu0 %305
        %307 = vset.pattern.permute.xlu0 0
        %308 = vperm.xlu0 %307, %v222
        %v309 = vpop.permute.xlu0 %308
        %310 = vset.pattern.permute.xlu0 0
        %311 = vperm.xlu0 %310, %v223
        %v312 = vpop.permute.xlu0 %311
        %313 = vset.pattern.permute.xlu0 0
        %314 = vperm.xlu0 %313, %v224
        %v315 = vpop.permute.xlu0 %314
        %316 = vset.pattern.permute.xlu0 0
        %317 = vperm.xlu0 %316, %v225
        %v318 = vpop.permute.xlu0 %317
        %319 = vset.pattern.permute.xlu0 0
        %320 = vperm.xlu0 %319, %v226
        %v321 = vpop.permute.xlu0 %320
        %322 = vset.pattern.permute.xlu0 0
        %323 = vperm.xlu0 %322, %v227
        %v324 = vpop.permute.xlu0 %323
        %325 = vset.pattern.permute.xlu0 0
        %326 = vperm.xlu0 %325, %v228
        %v327 = vpop.permute.xlu0 %326
        %328 = vset.pattern.permute.xlu0 0
        %329 = vperm.xlu0 %328, %v229
        %v330 = vpop.permute.xlu0 %329
        %vm331 = vcmp.eq.s32.totalorder %v231, %v234
        %vm332 = vcmp.eq.s32.totalorder %v231, %v237
        %vm333 = vcmp.eq.s32.totalorder %v231, %v240
        %vm334 = vcmp.eq.s32.totalorder %v231, %v243
        %vm335 = vcmp.eq.s32.totalorder %v231, %v246
        %vm336 = vcmp.eq.s32.totalorder %v231, %v249
        %vm337 = vcmp.eq.s32.totalorder %v231, %v252
        %vm338 = vcmp.eq.s32.totalorder %v231, %v255
        %vm339 = vcmp.eq.s32.totalorder %v231, %v258
        %vm340 = vcmp.eq.s32.totalorder %v231, %v261
        %vm341 = vcmp.eq.s32.totalorder %v231, %v264
        %vm342 = vcmp.eq.s32.totalorder %v231, %v267
        %vm343 = vcmp.eq.s32.totalorder %v231, %v270
        %vm344 = vcmp.eq.s32.totalorder %v231, %v273
        %vm345 = vcmp.eq.s32.totalorder %v231, %v276
        %vm346 = vcmp.eq.s32.totalorder %v231, %v279
        %vm347 = vcmp.eq.s32.totalorder %v231, %v282
        %vm348 = vcmp.eq.s32.totalorder %v231, %v285
        %vm349 = vcmp.eq.s32.totalorder %v231, %v288
        %vm350 = vcmp.eq.s32.totalorder %v231, %v291
        %vm351 = vcmp.eq.s32.totalorder %v231, %v294
        %vm352 = vcmp.eq.s32.totalorder %v231, %v297
        %vm353 = vcmp.eq.s32.totalorder %v231, %v300
        %vm354 = vcmp.eq.s32.totalorder %v231, %v303
        %vm355 = vcmp.eq.s32.totalorder %v231, %v306
        %vm356 = vcmp.eq.s32.totalorder %v231, %v309
        %vm357 = vcmp.eq.s32.totalorder %v231, %v312
        %vm358 = vcmp.eq.s32.totalorder %v231, %v315
        %vm359 = vcmp.eq.s32.totalorder %v231, %v318
        %vm360 = vcmp.eq.s32.totalorder %v231, %v321
        %vm361 = vcmp.eq.s32.totalorder %v231, %v324
        %vm362 = vcmp.eq.s32.totalorder %v231, %v327
        %vm363 = vcmp.eq.s32.totalorder %v231, %v330
        %v364 = vsel %vm331, 1, 0
        %v365 = vsel %vm332, 1, 0
        %v366 = vsel %vm333, 1, 0
        %v367 = vsel %vm334, 1, 0
        %v368 = vsel %vm335, 1, 0
        %v369 = vsel %vm336, 1, 0
        %v370 = vsel %vm337, 1, 0
        %v371 = vsel %vm338, 1, 0
        %v372 = vsel %vm339, 1, 0
        %v373 = vsel %vm340, 1, 0
        %v374 = vsel %vm341, 1, 0
        %v375 = vsel %vm342, 1, 0
        %v376 = vsel %vm343, 1, 0
        %v377 = vsel %vm344, 1, 0
        %v378 = vsel %vm345, 1, 0
        %v379 = vsel %vm346, 1, 0
        %v380 = vsel %vm347, 1, 0
        %v381 = vsel %vm348, 1, 0
        %v382 = vsel %vm349, 1, 0
        %v383 = vsel %vm350, 1, 0
        %v384 = vsel %vm351, 1, 0
        %v385 = vsel %vm352, 1, 0
        %v386 = vsel %vm353, 1, 0
        %v387 = vsel %vm354, 1, 0
        %v388 = vsel %vm355, 1, 0
        %v389 = vsel %vm356, 1, 0
        %v390 = vsel %vm357, 1, 0
        %v391 = vsel %vm358, 1, 0
        %v392 = vsel %vm359, 1, 0
        %v393 = vsel %vm360, 1, 0
        %v394 = vsel %vm361, 1, 0
        %v395 = vsel %vm362, 1, 0
        %v396 = vsel %vm363, 1, 0
        %v397 = vcvt.s32.f32 %v364
        %v398 = vcvt.s32.f32 %v365
        %v399 = vcvt.s32.f32 %v366
        %v400 = vcvt.s32.f32 %v367
        %v401 = vcvt.s32.f32 %v368
        %v402 = vcvt.s32.f32 %v369
        %v403 = vcvt.s32.f32 %v370
        %v404 = vcvt.s32.f32 %v371
        %v405 = vcvt.s32.f32 %v372
        %v406 = vcvt.s32.f32 %v373
        %v407 = vcvt.s32.f32 %v374
        %v408 = vcvt.s32.f32 %v375
        %v409 = vcvt.s32.f32 %v376
        %v410 = vcvt.s32.f32 %v377
        %v411 = vcvt.s32.f32 %v378
        %v412 = vcvt.s32.f32 %v379
        %v413 = vcvt.s32.f32 %v380
        %v414 = vcvt.s32.f32 %v381
        %v415 = vcvt.s32.f32 %v382
        %v416 = vcvt.s32.f32 %v383
        %v417 = vcvt.s32.f32 %v384
        %v418 = vcvt.s32.f32 %v385
        %v419 = vcvt.s32.f32 %v386
        %v420 = vcvt.s32.f32 %v387
        %v421 = vcvt.s32.f32 %v388
        %v422 = vcvt.s32.f32 %v389
        %v423 = vcvt.s32.f32 %v390
        %v424 = vcvt.s32.f32 %v391
        %v425 = vcvt.s32.f32 %v392
        %v426 = vcvt.s32.f32 %v393
        %v427 = vcvt.s32.f32 %v394
        %v428 = vcvt.s32.f32 %v395
        %v429 = vcvt.s32.f32 %v396
        %v430 = vpack.c.bf16 %v398, %v397
        %v431 = vpack.c.bf16 %v400, %v399
        %v432 = vpack.c.bf16 %v402, %v401
        %v433 = vpack.c.bf16 %v404, %v403
        %v434 = vpack.c.bf16 %v406, %v405
        %v435 = vpack.c.bf16 %v408, %v407
        %v436 = vpack.c.bf16 %v410, %v409
        %v437 = vpack.c.bf16 %v412, %v411
        %v438 = vpack.c.bf16 %v414, %v413
        %v439 = vpack.c.bf16 %v416, %v415
        %v440 = vpack.c.bf16 %v418, %v417
        %v441 = vpack.c.bf16 %v420, %v419
        %v442 = vpack.c.bf16 %v422, %v421
        %v443 = vpack.c.bf16 %v424, %v423
        %v444 = vpack.c.bf16 %v426, %v425
        %v445 = vpack.c.bf16 %v428, %v427
        %v446 = vpack.c.bf16 %v429, %v429
        %v447 = vld [vmem:[%s1] sm:$0xf]
        %v448 = vld [vmem:[%s1 + $0x4] sm:$0xf]
        %v449 = vld [vmem:[%s1 + $0x8] sm:$0xf]
        %v450 = vld [vmem:[%s1 + $0xc] sm:$0xf]
        %v451 = vld [vmem:[%s1 + $0x10] sm:$0xf]
        %v452 = vld [vmem:[%s1 + $0x14] sm:$0xf]
        %v453 = vld [vmem:[%s1 + $0x18] sm:$0xf]
        %v454 = vld [vmem:[%s1 + $0x1c] sm:$0xf]
        %v455 = vld [vmem:[%s1 + $0x20] sm:$0xf]
        %v456 = vld [vmem:[%s1 + $0x24] sm:$0xf]
        %v457 = vld [vmem:[%s1 + $0x28] sm:$0xf]
        %v458 = vld [vmem:[%s1 + $0x2c] sm:$0xf]
        %v459 = vld [vmem:[%s1 + $0x30] sm:$0xf]
        %v460 = vld [vmem:[%s1 + $0x34] sm:$0xf]
        %v461 = vld [vmem:[%s1 + $0x38] sm:$0xf]
        %v462 = vld [vmem:[%s1 + $0x3c] sm:$0xf]
        %v463 = vld [vmem:[%s2] sm:$0xf]
        %v464 = vld [vmem:[%s2 + $0x4] sm:$0xf]
        %v465 = vld [vmem:[%s2 + $0x8] sm:$0xf]
        %v466 = vld [vmem:[%s2 + $0xc] sm:$0xf]
        %v467 = vld [vmem:[%s2 + $0x10] sm:$0xf]
        %v468 = vld [vmem:[%s2 + $0x14] sm:$0xf]
        %v469 = vld [vmem:[%s2 + $0x18] sm:$0xf]
        %v470 = vld [vmem:[%s2 + $0x1c] sm:$0xf]
        %v471 = vld [vmem:[%s2 + $0x20] sm:$0xf]
        %v472 = vld [vmem:[%s2 + $0x24] sm:$0xf]
        %v473 = vld [vmem:[%s2 + $0x28] sm:$0xf]
        %v474 = vld [vmem:[%s2 + $0x2c] sm:$0xf]
        %v475 = vld [vmem:[%s2 + $0x30] sm:$0xf]
        %v476 = vld [vmem:[%s2 + $0x34] sm:$0xf]
        %v477 = vld [vmem:[%s2 + $0x38] sm:$0xf]
        %v478 = vld [vmem:[%s2 + $0x3c] sm:$0xf]
        %v495 = vunpack.c.l.b16 %v463
        %v496 = vunpack.c.l.b16 %v464
        %v497 = vunpack.c.l.b16 %v465
        %v498 = vunpack.c.l.b16 %v466
        %v499 = vunpack.c.l.b16 %v467
        %v500 = vunpack.c.l.b16 %v468
        %v501 = vunpack.c.l.b16 %v469
        %v502 = vunpack.c.l.b16 %v470
        %v503 = vunpack.c.l.b16 %v471
        %v504 = vunpack.c.l.b16 %v472
        %v505 = vunpack.c.l.b16 %v473
        %v506 = vunpack.c.l.b16 %v474
        %v507 = vunpack.c.l.b16 %v475
        %v508 = vunpack.c.l.b16 %v476
        %v509 = vunpack.c.l.b16 %v477
        %v510 = vunpack.c.l.b16 %v478
        %v511 = vpack.c.b16 %v496, %v495
        %v512 = vpack.c.b16 %v498, %v497
        %v513 = vpack.c.b16 %v500, %v499
        %v514 = vpack.c.b16 %v502, %v501
        %v515 = vpack.c.b16 %v504, %v503
        %v516 = vpack.c.b16 %v506, %v505
        %v517 = vpack.c.b16 %v508, %v507
        %v518 = vpack.c.b16 %v510, %v509
        %527 = vmatprep.subr.bf16.mxu0 0
        %528 = vmatpush1.bf16.msra.mxu0 %v518
        %529 = vmatprep.subr.bf16.mxu0 0
        %530 = vmatpush1.bf16.msra.mxu0 %v517
        %531 = vmatprep.subr.bf16.mxu0 0
        %532 = vmatpush1.bf16.msra.mxu0 %v516
        %533 = vmatprep.subr.bf16.mxu0 0
        %534 = vmatpush1.bf16.msra.mxu0 %v515
        %535 = vmatprep.subr.bf16.mxu0 0
        %536 = vmatpush1.bf16.msra.mxu0 %v514
        %537 = vmatprep.subr.bf16.mxu0 0
        %538 = vmatpush1.bf16.msra.mxu0 %v513
        %539 = vmatprep.subr.bf16.mxu0 0
        %540 = vmatpush1.bf16.msra.mxu0 %v512
        %541 = vmatprep.subr.bf16.mxu0 0
        %542 = vmatpush1.bf16.msra.mxu0 %v511
        %543 = vmatprep.subr.bf16.mxu0 0
        %544 = vmatpush2.bf16.msra.mxu0 0
        %545 = vmatprep.subr.bf16.mxu0 0
        %546 = vmatpush2.bf16.msra.mxu0 0
        %547 = vmatprep.subr.bf16.mxu0 0
        %548 = vmatpush2.bf16.msra.mxu0 0
        %549 = vmatprep.subr.bf16.mxu0 0
        %550 = vmatpush2.bf16.msra.mxu0 0
        %551 = vmatprep.subr.bf16.mxu0 0
        %552 = vmatpush2.bf16.msra.mxu0 0
        %553 = vmatprep.subr.bf16.mxu0 0
        %554 = vmatpush2.bf16.msra.mxu0 0
        %555 = vmatprep.subr.bf16.mxu0 0
        %556 = vmatpush2.bf16.msra.mxu0 0
        %557 = vmatprep.subr.bf16.mxu0 0
        %558 = vmatpush2.bf16.msra.mxu0 0
        %559 = vmatprep.mubr.bf16.mxu0 0
        %560 = vmatmul.mubr.bf16.gmra.mxu0 %v430
        %v561 = vpop.f32.mrf.mxu0
        %v562 = vadd.f32 0.0, %v561
        %v563 = vpop.f32.mrf.mxu0
        %v564 = vpop.f32.mrf.mxu0
        %v565 = vadd.f32 0.0, %v564
        %v566 = vpop.f32.mrf.mxu0
        %567 = vmatprep.mubr.bf16.mxu0 0
        %568 = vmatmul.mubr.bf16.gmra.mxu0 %v431
        %v569 = vpop.f32.mrf.mxu0
        %v570 = vadd.f32 0.0, %v569
        %v571 = vpop.f32.mrf.mxu0
        %v572 = vpop.f32.mrf.mxu0
        %v573 = vadd.f32 0.0, %v572
        %v574 = vpop.f32.mrf.mxu0
        %575 = vmatprep.mubr.bf16.mxu0 0
        %576 = vmatmul.mubr.bf16.gmra.mxu0 %v432
        %v577 = vpop.f32.mrf.mxu0
        %v578 = vadd.f32 0.0, %v577
        %v579 = vpop.f32.mrf.mxu0
        %v580 = vpop.f32.mrf.mxu0
        %v581 = vadd.f32 0.0, %v580
        %v582 = vpop.f32.mrf.mxu0
        %583 = vmatprep.mubr.bf16.mxu0 0
        %584 = vmatmul.mubr.bf16.gmra.mxu0 %v433
        %v585 = vpop.f32.mrf.mxu0
        %v586 = vadd.f32 0.0, %v585
        %v587 = vpop.f32.mrf.mxu0
        %v588 = vpop.f32.mrf.mxu0
        %v589 = vadd.f32 0.0, %v588
        %v590 = vpop.f32.mrf.mxu0
        %591 = vmatprep.mubr.bf16.mxu0 0
        %592 = vmatmul.mubr.bf16.gmra.mxu0 %v434
        %v593 = vpop.f32.mrf.mxu0
        %v594 = vadd.f32 0.0, %v593
        %v595 = vpop.f32.mrf.mxu0
        %v596 = vpop.f32.mrf.mxu0
        %v597 = vadd.f32 0.0, %v596
        %v598 = vpop.f32.mrf.mxu0
        %599 = vmatprep.mubr.bf16.mxu0 0
        %600 = vmatmul.mubr.bf16.gmra.mxu0 %v435
        %v601 = vpop.f32.mrf.mxu0
        %v602 = vadd.f32 0.0, %v601
        %v603 = vpop.f32.mrf.mxu0
        %v604 = vpop.f32.mrf.mxu0
        %v605 = vadd.f32 0.0, %v604
        %v606 = vpop.f32.mrf.mxu0
        %607 = vmatprep.mubr.bf16.mxu0 0
        %608 = vmatmul.mubr.bf16.gmra.mxu0 %v436
        %v609 = vpop.f32.mrf.mxu0
        %v610 = vadd.f32 0.0, %v609
        %v611 = vpop.f32.mrf.mxu0
        %v612 = vpop.f32.mrf.mxu0
        %v613 = vadd.f32 0.0, %v612
        %v614 = vpop.f32.mrf.mxu0
        %615 = vmatprep.mubr.bf16.mxu0 0
        %616 = vmatmul.mubr.bf16.gmra.mxu0 %v437
        %v617 = vpop.f32.mrf.mxu0
        %v618 = vadd.f32 0.0, %v617
        %v619 = vpop.f32.mrf.mxu0
        %v620 = vpop.f32.mrf.mxu0
        %v621 = vadd.f32 0.0, %v620
        %v622 = vpop.f32.mrf.mxu0
        %623 = vmatprep.mubr.bf16.mxu0 0
        %624 = vmatmul.mubr.bf16.gmra.mxu0 %v438
        %v625 = vpop.f32.mrf.mxu0
        %v626 = vadd.f32 0.0, %v625
        %v627 = vpop.f32.mrf.mxu0
        %v628 = vpop.f32.mrf.mxu0
        %v629 = vadd.f32 0.0, %v628
        %v630 = vpop.f32.mrf.mxu0
        %631 = vmatprep.mubr.bf16.mxu0 0
        %632 = vmatmul.mubr.bf16.gmra.mxu0 %v439
        %v633 = vpop.f32.mrf.mxu0
        %v634 = vadd.f32 0.0, %v633
        %v635 = vpop.f32.mrf.mxu0
        %v636 = vpop.f32.mrf.mxu0
        %v637 = vadd.f32 0.0, %v636
        %v638 = vpop.f32.mrf.mxu0
        %639 = vmatprep.mubr.bf16.mxu0 0
        %640 = vmatmul.mubr.bf16.gmra.mxu0 %v440
        %v641 = vpop.f32.mrf.mxu0
        %v642 = vadd.f32 0.0, %v641
        %v643 = vpop.f32.mrf.mxu0
        %v644 = vpop.f32.mrf.mxu0
        %v645 = vadd.f32 0.0, %v644
        %v646 = vpop.f32.mrf.mxu0
        %647 = vmatprep.mubr.bf16.mxu0 0
        %648 = vmatmul.mubr.bf16.gmra.mxu0 %v441
        %v649 = vpop.f32.mrf.mxu0
        %v650 = vadd.f32 0.0, %v649
        %v651 = vpop.f32.mrf.mxu0
        %v652 = vpop.f32.mrf.mxu0
        %v653 = vadd.f32 0.0, %v652
        %v654 = vpop.f32.mrf.mxu0
        %655 = vmatprep.mubr.bf16.mxu0 0
        %656 = vmatmul.mubr.bf16.gmra.mxu0 %v442
        %v657 = vpop.f32.mrf.mxu0
        %v658 = vadd.f32 0.0, %v657
        %v659 = vpop.f32.mrf.mxu0
        %v660 = vpop.f32.mrf.mxu0
        %v661 = vadd.f32 0.0, %v660
        %v662 = vpop.f32.mrf.mxu0
        %663 = vmatprep.mubr.bf16.mxu0 0
        %664 = vmatmul.mubr.bf16.gmra.mxu0 %v443
        %v665 = vpop.f32.mrf.mxu0
        %v666 = vadd.f32 0.0, %v665
        %v667 = vpop.f32.mrf.mxu0
        %v668 = vpop.f32.mrf.mxu0
        %v669 = vadd.f32 0.0, %v668
        %v670 = vpop.f32.mrf.mxu0
        %671 = vmatprep.mubr.bf16.mxu0 0
        %672 = vmatmul.mubr.bf16.gmra.mxu0 %v444
        %v673 = vpop.f32.mrf.mxu0
        %v674 = vadd.f32 0.0, %v673
        %v675 = vpop.f32.mrf.mxu0
        %v676 = vpop.f32.mrf.mxu0
        %v677 = vadd.f32 0.0, %v676
        %v678 = vpop.f32.mrf.mxu0
        %679 = vmatprep.mubr.bf16.mxu0 0
        %680 = vmatmul.mubr.bf16.gmra.mxu0 %v445
        %v681 = vpop.f32.mrf.mxu0
        %v682 = vadd.f32 0.0, %v681
        %v683 = vpop.f32.mrf.mxu0
        %v684 = vpop.f32.mrf.mxu0
        %v685 = vadd.f32 0.0, %v684
        %v686 = vpop.f32.mrf.mxu0
        %687 = vmatprep.mubr.bf16.mxu0 0
        %688 = vmatmul.mubr.bf16.gmra.mxu0 %v446
        %v689 = vpop.f32.mrf.mxu0
        %v690 = vadd.f32 0.0, %v689
        %v691 = vpop.f32.mrf.mxu0
        %v692 = vpop.f32.mrf.mxu0
        %v693 = vpop.f32.mrf.mxu0
        %694 = vdwg.mxu0
        %v711 = vunpack.c.l.b16 %v447
        %v712 = vunpack.c.l.b16 %v448
        %v713 = vunpack.c.l.b16 %v449
        %v714 = vunpack.c.l.b16 %v450
        %v715 = vunpack.c.l.b16 %v451
        %v716 = vunpack.c.l.b16 %v452
        %v717 = vunpack.c.l.b16 %v453
        %v718 = vunpack.c.l.b16 %v454
        %v719 = vunpack.c.l.b16 %v455
        %v720 = vunpack.c.l.b16 %v456
        %v721 = vunpack.c.l.b16 %v457
        %v722 = vunpack.c.l.b16 %v458
        %v723 = vunpack.c.l.b16 %v459
        %v724 = vunpack.c.l.b16 %v460
        %v725 = vunpack.c.l.b16 %v461
        %v726 = vunpack.c.l.b16 %v462
        %v727 = vpack.c.b16 %v712, %v711
        %v728 = vpack.c.b16 %v714, %v713
        %v729 = vpack.c.b16 %v716, %v715
        %v730 = vpack.c.b16 %v718, %v717
        %v731 = vpack.c.b16 %v720, %v719
        %v732 = vpack.c.b16 %v722, %v721
        %v733 = vpack.c.b16 %v724, %v723
        %v734 = vpack.c.b16 %v726, %v725
        %743 = vmatprep.subr.bf16.mxu0 0
        %744 = vmatpush1.bf16.msra.mxu0 %v734
        %745 = vmatprep.subr.bf16.mxu0 0
        %746 = vmatpush1.bf16.msra.mxu0 %v733
        %747 = vmatprep.subr.bf16.mxu0 0
        %748 = vmatpush1.bf16.msra.mxu0 %v732
        %749 = vmatprep.subr.bf16.mxu0 0
        %750 = vmatpush1.bf16.msra.mxu0 %v731
        %751 = vmatprep.subr.bf16.mxu0 0
        %752 = vmatpush1.bf16.msra.mxu0 %v730
        %753 = vmatprep.subr.bf16.mxu0 0
        %754 = vmatpush1.bf16.msra.mxu0 %v729
        %755 = vmatprep.subr.bf16.mxu0 0
        %756 = vmatpush1.bf16.msra.mxu0 %v728
        %757 = vmatprep.subr.bf16.mxu0 0
        %758 = vmatpush1.bf16.msra.mxu0 %v727
        %759 = vmatprep.subr.bf16.mxu0 0
        %760 = vmatpush2.bf16.msra.mxu0 0
        %761 = vmatprep.subr.bf16.mxu0 0
        %762 = vmatpush2.bf16.msra.mxu0 0
        %763 = vmatprep.subr.bf16.mxu0 0
        %764 = vmatpush2.bf16.msra.mxu0 0
        %765 = vmatprep.subr.bf16.mxu0 0
        %766 = vmatpush2.bf16.msra.mxu0 0
        %767 = vmatprep.subr.bf16.mxu0 0
        %768 = vmatpush2.bf16.msra.mxu0 0
        %769 = vmatprep.subr.bf16.mxu0 0
        %770 = vmatpush2.bf16.msra.mxu0 0
        %771 = vmatprep.subr.bf16.mxu0 0
        %772 = vmatpush2.bf16.msra.mxu0 0
        %773 = vmatprep.subr.bf16.mxu0 0
        %774 = vmatpush2.bf16.msra.mxu0 0
        %775 = vmatprep.mubr.bf16.mxu0 0
        %776 = vmatmul.mubr.bf16.gmra.mxu0 %v430
        %v777 = vpop.f32.mrf.mxu0
        %v778 = vadd.f32 %v562, %v777
        %v779 = vpop.f32.mrf.mxu0
        %v780 = vpop.f32.mrf.mxu0
        %v781 = vadd.f32 %v565, %v780
        %v782 = vpop.f32.mrf.mxu0
        %783 = vmatprep.mubr.bf16.mxu0 0
        %784 = vmatmul.mubr.bf16.gmra.mxu0 %v431
        %v785 = vpop.f32.mrf.mxu0
        %v786 = vadd.f32 %v570, %v785
        %v787 = vpop.f32.mrf.mxu0
        %v788 = vpop.f32.mrf.mxu0
        %v789 = vadd.f32 %v573, %v788
        %v790 = vpop.f32.mrf.mxu0
        %791 = vmatprep.mubr.bf16.mxu0 0
        %792 = vmatmul.mubr.bf16.gmra.mxu0 %v432
        %v793 = vpop.f32.mrf.mxu0
        %v794 = vadd.f32 %v578, %v793
        %v795 = vpop.f32.mrf.mxu0
        %v796 = vpop.f32.mrf.mxu0
        %v797 = vadd.f32 %v581, %v796
        %v798 = vpop.f32.mrf.mxu0
        %799 = vmatprep.mubr.bf16.mxu0 0
        %800 = vmatmul.mubr.bf16.gmra.mxu0 %v433
        %v801 = vpop.f32.mrf.mxu0
        %v802 = vadd.f32 %v586, %v801
        %v803 = vpop.f32.mrf.mxu0
        %v804 = vpop.f32.mrf.mxu0
        %v805 = vadd.f32 %v589, %v804
        %v806 = vpop.f32.mrf.mxu0
        %807 = vmatprep.mubr.bf16.mxu0 0
        %808 = vmatmul.mubr.bf16.gmra.mxu0 %v434
        %v809 = vpop.f32.mrf.mxu0
        %v810 = vadd.f32 %v594, %v809
        %v811 = vpop.f32.mrf.mxu0
        %v812 = vpop.f32.mrf.mxu0
        %v813 = vadd.f32 %v597, %v812
        %v814 = vpop.f32.mrf.mxu0
        %815 = vmatprep.mubr.bf16.mxu0 0
        %816 = vmatmul.mubr.bf16.gmra.mxu0 %v435
        %v817 = vpop.f32.mrf.mxu0
        %v818 = vadd.f32 %v602, %v817
        %v819 = vpop.f32.mrf.mxu0
        %v820 = vpop.f32.mrf.mxu0
        %v821 = vadd.f32 %v605, %v820
        %v822 = vpop.f32.mrf.mxu0
        %823 = vmatprep.mubr.bf16.mxu0 0
        %824 = vmatmul.mubr.bf16.gmra.mxu0 %v436
        %v825 = vpop.f32.mrf.mxu0
        %v826 = vadd.f32 %v610, %v825
        %v827 = vpop.f32.mrf.mxu0
        %v828 = vpop.f32.mrf.mxu0
        %v829 = vadd.f32 %v613, %v828
        %v830 = vpop.f32.mrf.mxu0
        %831 = vmatprep.mubr.bf16.mxu0 0
        %832 = vmatmul.mubr.bf16.gmra.mxu0 %v437
        %v833 = vpop.f32.mrf.mxu0
        %v834 = vadd.f32 %v618, %v833
        %v835 = vpop.f32.mrf.mxu0
        %v836 = vpop.f32.mrf.mxu0
        %v837 = vadd.f32 %v621, %v836
        %v838 = vpop.f32.mrf.mxu0
        %839 = vmatprep.mubr.bf16.mxu0 0
        %840 = vmatmul.mubr.bf16.gmra.mxu0 %v438
        %v841 = vpop.f32.mrf.mxu0
        %v842 = vadd.f32 %v626, %v841
        %v843 = vpop.f32.mrf.mxu0
        %v844 = vpop.f32.mrf.mxu0
        %v845 = vadd.f32 %v629, %v844
        %v846 = vpop.f32.mrf.mxu0
        %847 = vmatprep.mubr.bf16.mxu0 0
        %848 = vmatmul.mubr.bf16.gmra.mxu0 %v439
        %v849 = vpop.f32.mrf.mxu0
        %v850 = vadd.f32 %v634, %v849
        %v851 = vpop.f32.mrf.mxu0
        %v852 = vpop.f32.mrf.mxu0
        %v853 = vadd.f32 %v637, %v852
        %v854 = vpop.f32.mrf.mxu0
        %855 = vmatprep.mubr.bf16.mxu0 0
        %856 = vmatmul.mubr.bf16.gmra.mxu0 %v440
        %v857 = vpop.f32.mrf.mxu0
        %v858 = vadd.f32 %v642, %v857
        %v859 = vpop.f32.mrf.mxu0
        %v860 = vpop.f32.mrf.mxu0
        %v861 = vadd.f32 %v645, %v860
        %v862 = vpop.f32.mrf.mxu0
        %863 = vmatprep.mubr.bf16.mxu0 0
        %864 = vmatmul.mubr.bf16.gmra.mxu0 %v441
        %v865 = vpop.f32.mrf.mxu0
        %v866 = vadd.f32 %v650, %v865
        %v867 = vpop.f32.mrf.mxu0
        %v868 = vpop.f32.mrf.mxu0
        %v869 = vadd.f32 %v653, %v868
        %v870 = vpop.f32.mrf.mxu0
        %871 = vmatprep.mubr.bf16.mxu0 0
        %872 = vmatmul.mubr.bf16.gmra.mxu0 %v442
        %v873 = vpop.f32.mrf.mxu0
        %v874 = vadd.f32 %v658, %v873
        %v875 = vpop.f32.mrf.mxu0
        %v876 = vpop.f32.mrf.mxu0
        %v877 = vadd.f32 %v661, %v876
        %v878 = vpop.f32.mrf.mxu0
        %879 = vmatprep.mubr.bf16.mxu0 0
        %880 = vmatmul.mubr.bf16.gmra.mxu0 %v443
        %v881 = vpop.f32.mrf.mxu0
        %v882 = vadd.f32 %v666, %v881
        %v883 = vpop.f32.mrf.mxu0
        %v884 = vpop.f32.mrf.mxu0
        %v885 = vadd.f32 %v669, %v884
        %v886 = vpop.f32.mrf.mxu0
        %887 = vmatprep.mubr.bf16.mxu0 0
        %888 = vmatmul.mubr.bf16.gmra.mxu0 %v444
        %v889 = vpop.f32.mrf.mxu0
        %v890 = vadd.f32 %v674, %v889
        %v891 = vpop.f32.mrf.mxu0
        %v892 = vpop.f32.mrf.mxu0
        %v893 = vadd.f32 %v677, %v892
        %v894 = vpop.f32.mrf.mxu0
        %895 = vmatprep.mubr.bf16.mxu0 0
        %896 = vmatmul.mubr.bf16.gmra.mxu0 %v445
        %v897 = vpop.f32.mrf.mxu0
        %v898 = vadd.f32 %v682, %v897
        %v899 = vpop.f32.mrf.mxu0
        %v900 = vpop.f32.mrf.mxu0
        %v901 = vadd.f32 %v685, %v900
        %v902 = vpop.f32.mrf.mxu0
        %903 = vmatprep.mubr.bf16.mxu0 0
        %904 = vmatmul.mubr.bf16.gmra.mxu0 %v446
        %v905 = vpop.f32.mrf.mxu0
        %v906 = vadd.f32 %v690, %v905
        %v907 = vpop.f32.mrf.mxu0
        %v908 = vpop.f32.mrf.mxu0
        %v909 = vpop.f32.mrf.mxu0
        %910 = vdwg.mxu0
        %911 = vst [vmem:[%s176] sm:$0xff] %v778
        %912 = vst [vmem:[%s176 + $0x8] sm:$0xff] %v781
        %913 = vst [vmem:[%s176 + $0x10] sm:$0xff] %v786
        %914 = vst [vmem:[%s176 + $0x18] sm:$0xff] %v789
        %915 = vst [vmem:[%s176 + $0x20] sm:$0xff] %v794
        %916 = vst [vmem:[%s176 + $0x28] sm:$0xff] %v797
        %917 = vst [vmem:[%s176 + $0x30] sm:$0xff] %v802
        %918 = vst [vmem:[%s176 + $0x38] sm:$0xff] %v805
        %919 = vst [vmem:[%s176 + $0x40] sm:$0xff] %v810
        %920 = vst [vmem:[%s176 + $0x48] sm:$0xff] %v813
        %921 = vst [vmem:[%s176 + $0x50] sm:$0xff] %v818
        %922 = vst [vmem:[%s176 + $0x58] sm:$0xff] %v821
        %923 = vst [vmem:[%s176 + $0x60] sm:$0xff] %v826
        %924 = vst [vmem:[%s176 + $0x68] sm:$0xff] %v829
        %925 = vst [vmem:[%s176 + $0x70] sm:$0xff] %v834
        %926 = vst [vmem:[%s176 + $0x78] sm:$0xff] %v837
        %927 = vst [vmem:[%s176 + $0x80] sm:$0xff] %v842
        %928 = vst [vmem:[%s176 + $0x88] sm:$0xff] %v845
        %929 = vst [vmem:[%s176 + $0x90] sm:$0xff] %v850
        %930 = vst [vmem:[%s176 + $0x98] sm:$0xff] %v853
        %931 = vst [vmem:[%s176 + $0xa0] sm:$0xff] %v858
        %932 = vst [vmem:[%s176 + $0xa8] sm:$0xff] %v861
        %933 = vst [vmem:[%s176 + $0xb0] sm:$0xff] %v866
        %934 = vst [vmem:[%s176 + $0xb8] sm:$0xff] %v869
        %935 = vst [vmem:[%s176 + $0xc0] sm:$0xff] %v874
        %936 = vst [vmem:[%s176 + $0xc8] sm:$0xff] %v877
        %937 = vst [vmem:[%s176 + $0xd0] sm:$0xff] %v882
        %938 = vst [vmem:[%s176 + $0xd8] sm:$0xff] %v885
        %939 = vst [vmem:[%s176 + $0xe0] sm:$0xff] %v890
        %940 = vst [vmem:[%s176 + $0xe8] sm:$0xff] %v893
        %941 = vst [vmem:[%s176 + $0xf0] sm:$0xff] %v898
        %942 = vst [vmem:[%s176 + $0xf8] sm:$0xff] %v901
        %943 = vst [vmem:[%s176 + $0x100] sm:$0xff] %v906
        %s944 = sand.u32 %s93, 1
        %s945 = scalar_lea.sflag [#allocation3], %s944
        %s946 = sand.u32 %s93, 1
        %s947 = smul.addr %s946, 264
        %s948 = scalar_lea.vmem [#allocation2], %s947
        // Predicated region
        $region33: #{tpu_custom_call.1} parent=31 // pred_check
          %p949 = pneg %p103
        $region34: #{tpu_custom_call.1} parent=31 // pred_check_branch
          %951 = sbr.rel (%p949) target = $region36
        $region35: #{tpu_custom_call.1} parent=31 // pred_region
          %s952 = smul.u32 33, %s17
          %s953 = ssub.s32 65, %s952
          %p954 = scmp.lt.s32.totalorder %s953, 33
          %s955 = scalar_select %p954, %s953, 33
          %s956 = smul.u32 128, %s955
          %s958 = ssub.s32 4224, %s956
          %959 = vsyncadd %s945, %s958
          %p960 = scmp.ne.s32.totalorder 0, %s956
          %s961 = smul.addr %s952, 128
          %s962 = scalar_lea.hbm %s3, %s961
          %s963 = smul.u32 8, %s955
          %s964 = sshll.u32 %s948, 4
          %s965 = int_to_ptr.vmem [resolvable:$true] %s964
          %s966 = sshll.u32 %s963, 4
          %970 = dma.vmem_to_hbm [thread:$0]  (%p960), %s965, %s966, %s962, %s945, 128, 128, 8
        $region36: #{tpu_custom_call.1} parent=31 // pred_fallthru
          _
      $region32: #{tpu_custom_call.1} parent=5 // pred_fallthru
        _
      %p971 = scmp.le.s32.totalorder 2, %s12
      // Predicated region
      $region37: #{tpu_custom_call.1} parent=5 // pred_check
        %p972 = pneg %p971
      $region38: #{tpu_custom_call.1} parent=5 // pred_check_branch
        %974 = sbr.rel (%p972) target = $region40
      $region39: #{tpu_custom_call.1} parent=5 // pred_region
        %s975 = ssub.s32 %s12, 2
        // Predicated region
        $region41: #{tpu_custom_call.1} parent=39 // pred_check
          %p976 = pneg %p109
        $region42: #{tpu_custom_call.1} parent=39 // pred_check_branch
          %978 = sbr.rel (%p976) target = $region44
        $region43: #{tpu_custom_call.1} parent=39 // pred_region
          %s979 = sand.u32 %s94, 1
          %s980 = scalar_lea.sflag [#allocation3], %s979
          %s981 = sand.u32 %s94, 1
          %s982 = smul.addr %s981, 264
          %s983 = scalar_lea.vmem [#allocation2], %s982
          %984 = dma.done %s980, 4224
        $region44: #{tpu_custom_call.1} parent=39 // pred_fallthru
          _
      $region40: #{tpu_custom_call.1} parent=5 // pred_fallthru
        _
    $region6: #{tpu_custom_call.1} parent=1 // loop_footer
      %s16 = sadd.s32 1, %s12
    $region7: #{tpu_custom_call.1} parent=1 // loop_footer_branch
      %11 = sbr.rel target = $region3
    $region8: #{tpu_custom_call.1} parent=1 // loop_exit
      _
    %985 = vsyncpa [#allocation3], 1
    %s986 = scalar_lea.sflag [#allocation3], 1
    %987 = vsyncpa %s986, 1

</llo_original>
